<compile_context>
chip_gen: v7x
topology: tpu7x:2x2x1
jax: 0.10.0
libtpu: 0.0.40
codegen_flags: <defaults>
</compile_context>

<pallas_src>
import functools

import jax
import jax.numpy as jnp
from jax.experimental import pallas as pl
from jax.experimental.pallas import tpu as pltpu

_LANES = 128
_VMEM_LIMIT_BYTES = 32 << 20   # explicit scoped-VMEM request; safe on v5e/v6e/v7x
_VMEM_TILE_BUDGET = 24 << 20   # budget for DMA blocks (x2) + elementwise temps


def _focal_loss_kernel(prob_ref, label_ref, out_ref, acc_ref, *,
                       alpha, gamma, if_fl, rows_per_tile, tiles_per_chunk,
                       n_valid_rows, need_row_mask):
    """prob_ref: (C, rows, L) f32, label_ref: (rows, L) i32,
    out_ref: (1, L) f32 per-(batch, chunk) lane partial sums,
    acc_ref: (8, L) f32 running accumulator (sublane-folded)."""
    j = pl.program_id(2)

    lbl = label_ref[...]                              # (rows_per_tile, L) i32
    shape = lbl.shape
    lanes = shape[1]

    # Select true-class probability / alpha: one log per pixel instead of C,
    # and no inf*0 NaN hazard from -log(p) at non-true classes.
    # Defaults p_t=1, a_t=0 -> out-of-range labels contribute exactly 0
    # (matches torch's all-zero one-hot row).
    p_t = jnp.ones(shape, jnp.float32)
    a_t = jnp.zeros(shape, jnp.float32)
    for c in range(len(alpha)):                       # C is small & static: unrolled
        m = lbl == c
        p_t = jnp.where(m, prob_ref[c], p_t)
        a_t = jnp.where(m, alpha[c], a_t)

    # Accumulate the NEGATED loss: a_t * log(p_t) * (1-p_t)^gamma.
    # The single negate is folded into the (1, L) finalize store.
    neg_loss = a_t * jnp.log(p_t)                     # single EUP op per pixel
    if if_fl:
        om = 1.0 - p_t
        g = float(gamma)
        if g == round(g) and 1.0 <= g <= 8.0:         # integer gamma: VPU muls only
            f = om
            for _ in range(int(g) - 1):
                f = f * om
        elif g == 0.0:
            f = None
        else:
            f = jnp.power(om, g)                      # generic fallback (EUP)
        if f is not None:
            neg_loss = f * neg_loss

    if need_row_mask:
        # Edge tiles read rows past the true extent (undefined label/prob
        # bytes): select-zero them. where() is a select, so NaNs are dropped.
        tile_idx = pl.program_id(1) * tiles_per_chunk + j
        row_ids = (tile_idx * rows_per_tile +
                   jax.lax.broadcasted_iota(jnp.int32, shape, 0))
        neg_loss = jnp.where(row_ids < n_valid_rows, neg_loss, 0.0)

    if rows_per_tile % 8 == 0:
        # Fold the tile into an (8, L) running sum: pure vreg adds (no XLU),
        # and only one accumulator read-modify-write per grid step.
        @pl.when(j == 0)
        def _init():
            acc_ref[...] = jnp.zeros_like(acc_ref)

        acc_ref[...] += neg_loss.reshape(rows_per_tile // 8, 8, lanes).sum(axis=0)

        @pl.when(j == pl.num_programs(2) - 1)
        def _finalize():
            out_ref[...] = -jnp.sum(acc_ref[...], axis=0, keepdims=True)
    else:
        # Tiny images: rows_per_tile == full row count (< 8) -> exactly one
        # grid step along j; reduce and store directly (acc unused).
        out_ref[...] = -jnp.sum(neg_loss, axis=0, keepdims=True)


def _pick_tile_rows(n_rows, num_class, lanes, budget_bytes=_VMEM_TILE_BUDGET):
    """Largest row tile whose VMEM footprint (double-buffered prob+label DMA
    blocks plus ~6 full-block f32 elementwise temporaries the compiler
    materializes) fits the budget. No artificial clamp: bigger tiles amortize
    the ~0.35 us per-grid-step overhead (biggest relative win on v7x)."""
    dma_row = (num_class * 4 + 4) * lanes             # f32 prob planes + i32 label
    tmp_row = 6 * 4 * lanes                           # p_t/a_t/mask/neg_loss/om/f
    cap = budget_bytes // (2 * dma_row + tmp_row)
    cap -= cap % 8
    if n_rows < 8:
        return n_rows                                 # full extent (legal block)
    return max(8, min(cap, (n_rows // 8) * 8))


def focal_loss(prob, label, alpha, *, gamma=2.0, reduction="mean", if_fl=True):
    """prob: (B, C, H, W) softmax probabilities; label: (B, H, W) int labels."""
    assert reduction in ("mean", "sum")
    # TODO(synk): reduction=None (per-pixel loss map output) not implemented here.
    B, C, H, W = prob.shape
    alpha = tuple(float(a) for a in alpha)
    assert len(alpha) == C

    n_hw = H * W
    # TODO(synk): bf16-prob / int8-label pass-through fast path (only a win if
    # upstream already emits those dtypes); f32/int32 used here.
    prob_f = prob.astype(jnp.float32)
    label_i = label.astype(jnp.int32)

    if n_hw % _LANES == 0:
        # Free contiguous reshape: pixels on (sublane, lane), 128-lane dense.
        # No padding -> no extra HBM pass over prob.
        n_rows, lanes = n_hw // _LANES, _LANES
        prob_in = prob_f.reshape(B, C, n_rows, lanes)
        label_in = label_i.reshape(B, n_rows, lanes)
    else:
        # Ragged pixel count: tile (H, W) directly -- still no pad/copy of
        # prob; edge tiles masked by row index inside the kernel.
        n_rows, lanes = H, W
        prob_in = prob_f
        label_in = label_i

    tile_r = _pick_tile_rows(n_rows, C, lanes)
    n_tiles = -(-n_rows // tile_r)
    assert tile_r % 8 == 0 or n_tiles == 1

    # Megacore: B is a parallel axis; when B is odd (e.g. 1) also split the
    # row tiles into 2 parallel chunks so v7x's 2nd TensorCore is not idle.
    n_chunks = 2 if (B % 2 == 1 and n_tiles >= 2 and n_tiles % 2 == 0) else 1
    tpc = n_tiles // n_chunks
    need_mask = (n_tiles * tile_r != n_rows)

    kernel = functools.partial(
        _focal_loss_kernel, alpha=alpha, gamma=float(gamma), if_fl=bool(if_fl),
        rows_per_tile=tile_r, tiles_per_chunk=tpc, n_valid_rows=n_rows,
        need_row_mask=need_mask)

    partials = pl.pallas_call(
        kernel,
        out_shape=jax.ShapeDtypeStruct((B * n_chunks, 1, lanes), jnp.float32),
        grid_spec=pltpu.PrefetchScalarGridSpec(
            num_scalar_prefetch=0,
            grid=(B, n_chunks, tpc),
            in_specs=[
                # batch dim squeezed (None); pixels on (sublane, lane)
                pl.BlockSpec((None, C, tile_r, lanes),
                             lambda b, ck, j: (b, 0, ck * tpc + j, 0)),
                pl.BlockSpec((None, tile_r, lanes),
                             lambda b, ck, j: (b, ck * tpc + j, 0)),
            ],
            out_specs=pl.BlockSpec((None, 1, lanes),
                                   lambda b, ck, j: (b * n_chunks + ck, 0, 0)),
            scratch_shapes=[pltpu.VMEM((8, lanes), jnp.float32)],
        ),
        compiler_params=pltpu.CompilerParams(
            dimension_semantics=("parallel", "parallel", "arbitrary"),
            vmem_limit_bytes=_VMEM_LIMIT_BYTES),
    )(prob_in, label_in)

    total = jnp.sum(partials)                         # (B*chunks, 1, L) -> scalar
    if reduction == "mean":
        return total / (B * n_hw)                     # true pixel count, not padded
    return total


def focal_loss_ref(prob_nchw, label, alpha, *, gamma=2.0, reduction="mean", if_fl=True):
    """Pure-JAX reference mirroring the torch module."""
    B, C, H, W = prob_nchw.shape
    alpha = jnp.asarray(alpha, jnp.float32)
    one_hot = (label[:, None, :, :] ==
               jnp.arange(C)[None, :, None, None]).astype(jnp.float32)
    alpha_map = jnp.broadcast_to(alpha[None, :, None, None], prob_nchw.shape)
    ce = -jnp.log(prob_nchw) * one_hot
    loss = alpha_map * ce
    if if_fl:
        loss = jnp.power(1.0 - prob_nchw, gamma) * loss
    loss = loss.sum(axis=1)
    return jnp.mean(loss) if reduction == "mean" else jnp.sum(loss)


if __name__ == "__main__":
    key = jax.random.PRNGKey(0)
    # (B, C, H, W, alpha, gamma, if_fl, reductions)
    configs = [
        # module defaults; H*W % 128 == 0 -> flat path, tiny-row fallback
        (2, 3, 16, 16, [0.2, 0.3, 0.5], 2.0, True, ("mean", "sum")),
        # non-integer gamma (jnp.power path)
        (2, 3, 16, 16, [0.2, 0.3, 0.5], 1.5, True, ("mean",)),
        # focal factor disabled
        (2, 3, 16, 16, [0.2, 0.3, 0.5], 2.0, False, ("mean",)),
        # ragged H*W -> direct (H, W) tiling, B odd -> 2 parallel chunks, row mask
        (1, 4, 50, 60, [0.1, 0.2, 0.3, 0.4], 2.0, True, ("mean",)),
        # ragged H*W, multi-step accumulation along the row-tile axis, gamma=3
        (2, 3, 50, 60, [0.2, 0.3, 0.5], 3.0, True, ("sum",)),
    ]
    for (B, C, H, W, alpha, gamma, if_fl, reductions) in configs:
        key, k1, k2 = jax.random.split(key, 3)
        logits = jax.random.normal(k1, (B, C, H, W), dtype=jnp.float32)
        prob = jax.nn.softmax(logits, axis=1)          # module expects softmax'd probs
        label = jax.random.randint(k2, (B, H, W), 0, C, dtype=jnp.int32)
        for reduction in reductions:
            out = jax.block_until_ready(
                focal_loss(prob, label, alpha, gamma=gamma,
                           reduction=reduction, if_fl=if_fl))
            ref = focal_loss_ref(prob, label, alpha, gamma=gamma,
                                 reduction=reduction, if_fl=if_fl)
            assert jnp.allclose(out, ref, rtol=2e-5, atol=1e-5), (
                (B, C, H, W, gamma, if_fl, reduction), out, ref)
    print("KERNEL_OK")
</pallas_src>

<mosaic_0001>
module attributes {stable_mosaic.version = 11 : i64} {
  func.func @_focal_loss_kernel(%arg0: i32, %arg1: i32, %arg2: i32, %arg3: memref<1x3x2x128xf32, #tpu.memory_space<vmem>>, %arg4: memref<1x2x128xi32, #tpu.memory_space<vmem>>, %arg5: memref<1x1x128xf32, #tpu.memory_space<vmem>>, %arg6: memref<8x128xf32, #tpu.memory_space<vmem>>) attributes {dimension_semantics = [#tpu.dimension_semantics<parallel>, #tpu.dimension_semantics<parallel>, #tpu.dimension_semantics<arbitrary>], iteration_bounds = array<i64: 2, 1, 1>, scalar_prefetch = 0 : i64, scratch_operands = 1 : i64, tpu.core_type = #tpu.core_type<tc>, window_params = [{transform_indices = @transform_0, window_bounds = array<i64: 1, 3, 2, 128>}, {transform_indices = @transform_1, window_bounds = array<i64: 1, 2, 128>}, {transform_indices = @transform_2, window_bounds = array<i64: 1, 1, 128>}]} {
    %c0 = arith.constant 0 : index
    %c0_0 = arith.constant 0 : index
    %c0_1 = arith.constant 0 : index
    %0 = vector.load %arg4[%c0, %c0_0, %c0_1] : memref<1x2x128xi32, #tpu.memory_space<vmem>>, vector<1x2x128xi32>
    %1 = vector.shape_cast %0 : vector<1x2x128xi32> to vector<2x128xi32>
    %cst = arith.constant 1.000000e+00 : f32
    %2 = vector.broadcast %cst : f32 to vector<2x128xf32>
    %cst_2 = arith.constant 0.000000e+00 : f32
    %3 = vector.broadcast %cst_2 : f32 to vector<2x128xf32>
    %c0_i32 = arith.constant 0 : i32
    %4 = vector.broadcast %c0_i32 : i32 to vector<2x128xi32>
    %5 = arith.cmpi eq, %1, %4 : vector<2x128xi32>
    %c0_3 = arith.constant 0 : index
    %c0_4 = arith.constant 0 : index
    %c0_5 = arith.constant 0 : index
    %c0_6 = arith.constant 0 : index
    %6 = vector.load %arg3[%c0_3, %c0_4, %c0_5, %c0_6] : memref<1x3x2x128xf32, #tpu.memory_space<vmem>>, vector<1x1x2x128xf32>
    %7 = vector.shape_cast %6 : vector<1x1x2x128xf32> to vector<2x128xf32>
    %8 = arith.select %5, %7, %2 : vector<2x128xi1>, vector<2x128xf32>
    %cst_7 = arith.constant 2.000000e-01 : f32
    %9 = vector.broadcast %cst_7 : f32 to vector<2x128xf32>
    %10 = arith.select %5, %9, %3 : vector<2x128xi1>, vector<2x128xf32>
    %c1_i32 = arith.constant 1 : i32
    %11 = vector.broadcast %c1_i32 : i32 to vector<2x128xi32>
    %12 = arith.cmpi eq, %1, %11 : vector<2x128xi32>
    %c0_8 = arith.constant 0 : index
    %c1 = arith.constant 1 : index
    %c0_9 = arith.constant 0 : index
    %c0_10 = arith.constant 0 : index
    %13 = vector.load %arg3[%c0_8, %c1, %c0_9, %c0_10] : memref<1x3x2x128xf32, #tpu.memory_space<vmem>>, vector<1x1x2x128xf32>
    %14 = vector.shape_cast %13 : vector<1x1x2x128xf32> to vector<2x128xf32>
    %15 = arith.select %12, %14, %8 : vector<2x128xi1>, vector<2x128xf32>
    %cst_11 = arith.constant 3.000000e-01 : f32
    %16 = vector.broadcast %cst_11 : f32 to vector<2x128xf32>
    %17 = arith.select %12, %16, %10 : vector<2x128xi1>, vector<2x128xf32>
    %c2_i32 = arith.constant 2 : i32
    %18 = vector.broadcast %c2_i32 : i32 to vector<2x128xi32>
    %19 = arith.cmpi eq, %1, %18 : vector<2x128xi32>
    %c0_12 = arith.constant 0 : index
    %c2 = arith.constant 2 : index
    %c0_13 = arith.constant 0 : index
    %c0_14 = arith.constant 0 : index
    %20 = vector.load %arg3[%c0_12, %c2, %c0_13, %c0_14] : memref<1x3x2x128xf32, #tpu.memory_space<vmem>>, vector<1x1x2x128xf32>
    %21 = vector.shape_cast %20 : vector<1x1x2x128xf32> to vector<2x128xf32>
    %22 = arith.select %19, %21, %15 : vector<2x128xi1>, vector<2x128xf32>
    %cst_15 = arith.constant 5.000000e-01 : f32
    %23 = vector.broadcast %cst_15 : f32 to vector<2x128xf32>
    %24 = arith.select %19, %23, %17 : vector<2x128xi1>, vector<2x128xf32>
    %25 = math.log %22 : vector<2x128xf32>
    %26 = arith.mulf %24, %25 : vector<2x128xf32>
    %cst_16 = arith.constant 1.000000e+00 : f32
    %27 = vector.broadcast %cst_16 : f32 to vector<2x128xf32>
    %28 = arith.subf %27, %22 : vector<2x128xf32>
    %29 = arith.mulf %28, %28 : vector<2x128xf32>
    %30 = arith.mulf %29, %26 : vector<2x128xf32>
    %cst_17 = arith.constant dense<0.000000e+00> : vector<128xf32>
    %31 = vector.multi_reduction <add>, %30, %cst_17 [0] : vector<2x128xf32> to vector<128xf32>
    %32 = vector.shape_cast %31 : vector<128xf32> to vector<1x128xf32>
    %cst_18 = arith.constant 0.000000e+00 : f32
    %33 = vector.broadcast %cst_18 : f32 to vector<1x128xf32>
    %34 = arith.subf %33, %32 : vector<1x128xf32>
    %c0_19 = arith.constant 0 : index
    %c0_20 = arith.constant 0 : index
    %c0_21 = arith.constant 0 : index
    %35 = vector.load %arg5[%c0_19, %c0_20, %c0_21] : memref<1x1x128xf32, #tpu.memory_space<vmem>>, vector<1x1x128xf32>
    %36 = vector.shape_cast %35 : vector<1x1x128xf32> to vector<1x128xf32>
    %37 = vector.shape_cast %34 : vector<1x128xf32> to vector<1x1x128xf32>
    tpu.vector_store %arg5[%c0_19, %c0_20, %c0_21], %37 {strides = array<i32>} : memref<1x1x128xf32, #tpu.memory_space<vmem>>, vector<1x1x128xf32>,
    return
  }
  func.func @transform_0(%arg0: i32, %arg1: i32, %arg2: i32) -> (i32, i32, i32, i32) {
    %c1_i32 = arith.constant 1 : i32
    %0 = arith.muli %arg1, %c1_i32 : i32
    %1 = arith.addi %0, %arg2 : i32
    %c0_i32 = arith.constant 0 : i32
    %c0_i32_0 = arith.constant 0 : i32
    %c0_i32_1 = arith.constant 0 : i32
    return %arg0, %c0_i32, %1, %c0_i32_0 : i32, i32, i32, i32
  }
  func.func @transform_1(%arg0: i32, %arg1: i32, %arg2: i32) -> (i32, i32, i32) {
    %c1_i32 = arith.constant 1 : i32
    %0 = arith.muli %arg1, %c1_i32 : i32
    %1 = arith.addi %0, %arg2 : i32
    %c0_i32 = arith.constant 0 : i32
    %c0_i32_0 = arith.constant 0 : i32
    return %arg0, %1, %c0_i32 : i32, i32, i32
  }
  func.func @transform_2(%arg0: i32, %arg1: i32, %arg2: i32) -> (i32, i32, i32) {
    %c1_i32 = arith.constant 1 : i32
    %0 = arith.muli %arg0, %c1_i32 : i32
    %1 = arith.addi %0, %arg1 : i32
    %c0_i32 = arith.constant 0 : i32
    %c0_i32_0 = arith.constant 0 : i32
    %c0_i32_1 = arith.constant 0 : i32
    return %1, %c0_i32, %c0_i32_0 : i32, i32, i32
  }
}

</mosaic_0001>

<llo_original>
// kernel: tpu_custom_call.1
$region0: #{tpu_custom_call.1}
  #allocation0 [shape = 'u32[]', space=smem, size = 0x4, offset = 0x4, fixed_abs, tag = 'smem constant byte address 0x4 - core index']
  #allocation1 [shape = 'u32[144,128]{1,0:T(1,128)}', space=vmem, size = 0x12000, scoped, tag = 'internal scratch']
  #allocation2 [shape = 'f32[8,128]{1,0:T(8,128)}', space=vmem, size = 0x1000, scoped, tag = 'scratch operand']
  %s0 = inlined_call_operand.hbm [shape: f32[2,3,2,128], index: 0, kind: input, shape index: {}]
  %s1 = inlined_call_operand.hbm [shape: s32[2,2,128], index: 1, kind: input, shape index: {}]
  %s2 = inlined_call_operand.hbm [shape: f32[2,1,128], index: 2, kind: output, shape index: {}]
  %s3 = sld [smem:[#allocation0]]
  $region49: #{tpu_custom_call.1} parent=0
    _
  %s5 = ssub.s32 1, %s3
  %s6 = scalar_select 0, %s5, %s3
  $region1: #{tpu_custom_call.1} parent=0
    #allocation3 [shape = 'u8[6144]{0}', space=vmem, size = 0x1800, scoped, tag = 'input window, operand 0']
    #allocation4 [shape = 's32[2]{0}', space=sflag, size = 0x8, scoped, tag = 'scoped memory for tpu_custom_call.1']
    #allocation5 [shape = 's32[2]{0}', space=sflag, size = 0x8, scoped, tag = 'scoped memory for tpu_custom_call.1']
    #allocation6 [shape = 'u8[2048]{0}', space=vmem, size = 0x800, scoped, tag = 'input window, operand 1']
    #allocation7 [shape = 's32[2]{0}', space=sflag, size = 0x8, scoped, tag = 'scoped memory for tpu_custom_call.1']
    #allocation8 [shape = 'u8[1024]{0}', space=vmem, size = 0x400, scoped, tag = 'output window, operand 0']
    %7 = vsyncpa [#allocation4], 0
    %s8 = scalar_lea.sflag [#allocation4], 1
    %9 = vsyncpa %s8, 0
    %10 = vsyncpa [#allocation7], 0
    %s11 = scalar_lea.sflag [#allocation7], 1
    %12 = vsyncpa %s11, 0
    %13 = vsyncpa [#allocation5], 0
    %s14 = scalar_lea.sflag [#allocation5], 1
    %15 = vsyncpa %s14, 0
    loop: start=0, step=1, limit=4
    $region2: #{tpu_custom_call.1} parent=1 // loop_pre_header
      _
    $region3: #{tpu_custom_call.1} parent=1 // loop_header
      %s17 = sphi 0, %s21
      %p18 = scmp.ge.s32.totalorder %s17, 4
      %s24 = sphi 0, %s43
      %s25 = sphi 0, %s39
      %s26 = sphi 0, %s35
      %s27 = sphi 0, %s24
      %s28 = sphi 0, %s25
      %s29 = sphi 0, %s26
      %s30 = sphi 0, %s27
      %s31 = sphi 0, %s28
      %s32 = sphi 0, %s29
      %s50 = sphi 0, %s52
      %s53 = sphi 0, %s50
      %s54 = sphi 0, %s53
      %s70 = sphi 0, %s54
      %s80 = sphi 0, %s82
      %s83 = sphi 0, %s80
      %s84 = sphi 0, %s83
      %s100 = sphi 0, %s84
      %s108 = sphi 0, %s110
      %s111 = sphi 0, %s108
      %s112 = sphi 0, %s111
      %s128 = sphi 0, %s112
    $region4: #{tpu_custom_call.1} parent=1 // loop_header_branch
      %20 = sbr.rel (%p18) target = $region8
    $region5: #{tpu_custom_call.1} parent=1 // loop_body
      %s22 = ssub.s32 %s17, 1
      %s23 = ssub.s32 %s17, 2
      %s33 = sadd.s32 1, %s26
      %p34 = scmp.ge.s32.totalorder %s33, 1
      %s35 = scalar_select %p34, 0, %s33
      %s36 = sadd.s32 1, %s25
      %s37 = scalar_select %p34, %s36, %s25
      %p38 = scmp.ge.s32.totalorder %s37, 1
      %s39 = scalar_select %p38, 0, %s37
      %s40 = sadd.s32 1, %s24
      %s41 = scalar_select %p38, %s40, %s24
      %p42 = scmp.ge.s32.totalorder %s41, 2
      %s43 = scalar_select %p42, 0, %s41
      %s44 = sadd.s32 %s25, %s26
      %s45 = sadd.s32 %s39, %s35
      %s46 = ssub.s32 %s24, %s43
      %s47 = ssub.s32 %s44, %s45
      %s48 = sor.u32 %s46, %s47
      %p49 = scmp.eq.s32.totalorder %s48, 0
      %s51 = sadd.s32 %s50, 1
      %s52 = scalar_select %p49, %s50, %s51
      %p55 = pneg %p49
      %p56 = scmp.eq.s32.totalorder %s17, 1
      %p57 = por %p55, %p56
      %p58 = scmp.ne.s32.totalorder %s50, %s53
      %p59 = scmp.eq.s32.totalorder %s17, 0
      %p60 = por %p58, %p59
      %p61 = scmp.ne.s32.totalorder %s50, %s53
      %p62 = scmp.eq.s32.totalorder %s22, 1
      %p63 = por %p61, %p62
      %p64 = scmp.ne.s32.totalorder %s53, %s54
      %p65 = scmp.eq.s32.totalorder %s22, 0
      %p66 = por %p64, %p65
      %p67 = scmp.ne.s32.totalorder %s53, %s54
      %p68 = scmp.eq.s32.totalorder %s23, 1
      %p69 = por %p67, %p68
      %p71 = scmp.ne.s32.totalorder %s54, %s70
      %p72 = scmp.eq.s32.totalorder %s23, 0
      %p73 = por %p71, %p72
      %s74 = sadd.s32 %s25, %s26
      %s75 = sadd.s32 %s39, %s35
      %s76 = ssub.s32 %s24, %s43
      %s77 = ssub.s32 %s74, %s75
      %s78 = sor.u32 %s76, %s77
      %p79 = scmp.eq.s32.totalorder %s78, 0
      %s81 = sadd.s32 %s80, 1
      %s82 = scalar_select %p79, %s80, %s81
      %p85 = pneg %p79
      %p86 = scmp.eq.s32.totalorder %s17, 1
      %p87 = por %p85, %p86
      %p88 = scmp.ne.s32.totalorder %s80, %s83
      %p89 = scmp.eq.s32.totalorder %s17, 0
      %p90 = por %p88, %p89
      %p91 = scmp.ne.s32.totalorder %s80, %s83
      %p92 = scmp.eq.s32.totalorder %s22, 1
      %p93 = por %p91, %p92
      %p94 = scmp.ne.s32.totalorder %s83, %s84
      %p95 = scmp.eq.s32.totalorder %s22, 0
      %p96 = por %p94, %p95
      %p97 = scmp.ne.s32.totalorder %s83, %s84
      %p98 = scmp.eq.s32.totalorder %s23, 1
      %p99 = por %p97, %p98
      %p101 = scmp.ne.s32.totalorder %s84, %s100
      %p102 = scmp.eq.s32.totalorder %s23, 0
      %p103 = por %p101, %p102
      %s104 = sadd.s32 %s24, %s25
      %s105 = sadd.s32 %s43, %s39
      %s106 = ssub.s32 %s104, %s105
      %p107 = scmp.eq.s32.totalorder %s106, 0
      %s109 = sadd.s32 %s108, 1
      %s110 = scalar_select %p107, %s108, %s109
      %p113 = pneg %p107
      %p114 = scmp.eq.s32.totalorder %s17, 1
      %p115 = por %p113, %p114
      %p116 = scmp.ne.s32.totalorder %s108, %s111
      %p117 = scmp.eq.s32.totalorder %s17, 0
      %p118 = por %p116, %p117
      %p119 = scmp.ne.s32.totalorder %s108, %s111
      %p120 = scmp.eq.s32.totalorder %s22, 1
      %p121 = por %p119, %p120
      %p122 = scmp.ne.s32.totalorder %s111, %s112
      %p123 = scmp.eq.s32.totalorder %s22, 0
      %p124 = por %p122, %p123
      %p125 = scmp.ne.s32.totalorder %s111, %s112
      %p126 = scmp.eq.s32.totalorder %s23, 1
      %p127 = por %p125, %p126
      %p129 = scmp.ne.s32.totalorder %s112, %s128
      %p130 = scmp.eq.s32.totalorder %s23, 0
      %p131 = por %p129, %p130
      %p132 = scmp.le.s32.totalorder 1, %s17
      %p133 = scmp.lt.s32.totalorder %s17, 3
      %p134 = pnand %p132, %p133
      %p135 = pneg %p134
      // Predicated region
      $region9: #{tpu_custom_call.1} parent=5 // pred_check
        _
      $region10: #{tpu_custom_call.1} parent=5 // pred_check_branch
        %137 = sbr.rel (%p134) target = $region12
      $region11: #{tpu_custom_call.1} parent=5 // pred_region
        %s138 = ssub.s32 %s17, 1
      $region12: #{tpu_custom_call.1} parent=5 // pred_fallthru
        _
      %p139 = scmp.lt.s32.totalorder %s17, 2
      // Predicated region
      $region13: #{tpu_custom_call.1} parent=5 // pred_check
        %p140 = pneg %p139
      $region14: #{tpu_custom_call.1} parent=5 // pred_check_branch
        %142 = sbr.rel (%p140) target = $region16
      $region15: #{tpu_custom_call.1} parent=5 // pred_region
        // Predicated region
        $region17: #{tpu_custom_call.1} parent=15 // pred_check
          %p143 = pneg %p60
        $region18: #{tpu_custom_call.1} parent=15 // pred_check_branch
          %145 = sbr.rel (%p143) target = $region20
        $region19: #{tpu_custom_call.1} parent=15 // pred_region
          %s146 = sand.u32 %s50, 1
          %s147 = scalar_lea.sflag [#allocation4], %s146
          %s148 = sand.u32 %s50, 1
          %s149 = smul.addr %s148, 6
          %s150 = scalar_lea.vmem [#allocation3], %s149
          %s151 = sadd.s32 %s25, %s26
          %s153 = ssub.s32 96, 96
          %154 = vsyncadd %s147, %s153
          %s155 = smul.addr %s24, 3
          %s156 = sadd.s32 %s151, %s155
          %s157 = smul.addr %s156, 32
          %s158 = scalar_lea.hbm %s0, %s157
          %s159 = sshll.u32 %s150, 4
          %s160 = int_to_ptr.vmem [resolvable:$true] %s159
          %165 = dma.hbm_to_vmem [thread:$0]  %s158, 96, %s160, %s147, 32, 32, 2
        $region20: #{tpu_custom_call.1} parent=15 // pred_fallthru
          _
        // Predicated region
        $region21: #{tpu_custom_call.1} parent=15 // pred_check
          %p166 = pneg %p90
        $region22: #{tpu_custom_call.1} parent=15 // pred_check_branch
          %168 = sbr.rel (%p166) target = $region24
        $region23: #{tpu_custom_call.1} parent=15 // pred_region
          %s169 = sand.u32 %s80, 1
          %s170 = scalar_lea.sflag [#allocation7], %s169
          %s171 = sand.u32 %s80, 1
          %s172 = smul.addr %s171, 2
          %s173 = scalar_lea.vmem [#allocation6], %s172
          %s174 = sadd.s32 %s25, %s26
          %s176 = ssub.s32 32, 32
          %177 = vsyncadd %s170, %s176
          %s178 = sadd.s32 %s174, %s24
          %s179 = smul.addr %s178, 32
          %s180 = scalar_lea.hbm %s1, %s179
          %s182 = sshll.u32 %s173, 4
          %s183 = int_to_ptr.vmem [resolvable:$true] %s182
          %185 = dma.hbm_to_vmem [thread:$0]  %s180, 32, %s183, %s170
        $region24: #{tpu_custom_call.1} parent=15 // pred_fallthru
          _
      $region16: #{tpu_custom_call.1} parent=5 // pred_fallthru
        _
      %p186 = scmp.le.s32.totalorder 1, %s17
      %p187 = scmp.lt.s32.totalorder %s17, 3
      %p188 = pnand %p186, %p187
      %p189 = pneg %p188
      // Predicated region
      $region25: #{tpu_custom_call.1} parent=5 // pred_check
        _
      $region26: #{tpu_custom_call.1} parent=5 // pred_check_branch
        %191 = sbr.rel (%p188) target = $region28
      $region27: #{tpu_custom_call.1} parent=5 // pred_region
        %s192 = ssub.s32 %s17, 1
        %s193 = sand.u32 %s53, 1
        %s194 = scalar_lea.sflag [#allocation4], %s193
        %s195 = sand.u32 %s53, 1
        %s196 = smul.addr %s195, 6
        %s197 = scalar_lea.vmem [#allocation3], %s196
        // Predicated region
        $region29: #{tpu_custom_call.1} parent=27 // pred_check
          %p198 = pneg %p66
        $region30: #{tpu_custom_call.1} parent=27 // pred_check_branch
          %200 = sbr.rel (%p198) target = $region32
        $region31: #{tpu_custom_call.1} parent=27 // pred_region
          %201 = dma.done %s194, 96
        $region32: #{tpu_custom_call.1} parent=27 // pred_fallthru
          _
        %s202 = sand.u32 %s83, 1
        %s203 = scalar_lea.sflag [#allocation7], %s202
        %s204 = sand.u32 %s83, 1
        %s205 = smul.addr %s204, 2
        %s206 = scalar_lea.vmem [#allocation6], %s205
        // Predicated region
        $region33: #{tpu_custom_call.1} parent=27 // pred_check
          %p207 = pneg %p96
        $region34: #{tpu_custom_call.1} parent=27 // pred_check_branch
          %209 = sbr.rel (%p207) target = $region36
        $region35: #{tpu_custom_call.1} parent=27 // pred_region
          %210 = dma.done %s203, 32
        $region36: #{tpu_custom_call.1} parent=27 // pred_fallthru
          _
        %s211 = sand.u32 %s53, 1
        %s212 = scalar_lea.sflag [#allocation4], %s211
        %s213 = sand.u32 %s53, 1
        %s214 = smul.addr %s213, 6
        %s215 = scalar_lea.vmem [#allocation3], %s214
        %p216 = pneg %p66
        %p217 = pneg %p63
        %s218 = sand.u32 %s83, 1
        %s219 = scalar_lea.sflag [#allocation7], %s218
        %s220 = sand.u32 %s83, 1
        %s221 = smul.addr %s220, 2
        %s222 = scalar_lea.vmem [#allocation6], %s221
        %p223 = pneg %p96
        %p224 = pneg %p93
        %p225 = pneg %p124
        %p226 = pneg %p121
        %s227 = sand.u32 %s111, 1
        %s228 = scalar_lea.sflag [#allocation5], %s227
        %s229 = sand.u32 %s111, 1
        %s230 = scalar_lea.vmem [#allocation8], %s229
        %s231 = sadd.s32 %s28, %s29
        %s232 = sadd.s32 %s28, %s29
        %s233 = sadd.s32 %s27, %s28
        %v234 = vld [vmem:[%s206] sm:$0x3]
        %vm235 = vcmp.eq.s32.totalorder %v234, 0
        %v236 = vld [vmem:[%s197] sm:$0x3]
        %v237 = vsel %vm235, %v236, 1.0
        %v238 = vsel %vm235, 0.2, 0.0
        %vm239 = vcmp.eq.s32.totalorder %v234, 1
        %s240 = scalar_lea.vmem %s197, 2 [#allocation3]
        %v241 = vld [vmem:[%s240] sm:$0x3]
        %v242 = vsel %vm239, %v241, %v237
        %v243 = vsel %vm239, 0.3, %v238
        %vm244 = vcmp.eq.s32.totalorder %v234, 2
        %s245 = scalar_lea.vmem %s197, 4 [#allocation3]
        %v246 = vld [vmem:[%s245] sm:$0x3]
        %v247 = vsel %vm244, %v246, %v242
        %v248 = vsel %vm244, 0.5, %v243
        %v249 = vlog2.pop %v247
        %v250 = vmul.f32 %v249, 0.6931472
        %v251 = vmul.f32 %v248, %v250
        %v252 = vsub.f32 1.0, %v247
        %v253 = vmul.f32 %v252, %v252
        %v254 = vmul.f32 %v253, %v251
        %vm255 = vcmask 1041408
        %v256 = vsel %vm255, %v254, 0.0
        %v257 = vrot.slane %v256, 4
        %v258 = vadd.f32 %v256, %v257
        %v259 = vrot.slane %v258, 2
        %v260 = vadd.f32 %v258, %v259
        %v261 = vrot.slane %v260, 1
        %v262 = vadd.f32 %v260, %v261
        %v263 = vsub.f32 0.0, %v262
        %264 = vst [vmem:[%s230] sm:$0x1] %v263
        %s265 = sand.u32 %s111, 1
        %s266 = scalar_lea.sflag [#allocation5], %s265
        %s267 = sand.u32 %s111, 1
        %s268 = scalar_lea.vmem [#allocation8], %s267
        // Predicated region
        $region37: #{tpu_custom_call.1} parent=27 // pred_check
          %p269 = pneg %p121
        $region38: #{tpu_custom_call.1} parent=27 // pred_check_branch
          %271 = sbr.rel (%p269) target = $region40
        $region39: #{tpu_custom_call.1} parent=27 // pred_region
          %s272 = sadd.s32 %s27, %s28
          %s274 = ssub.s32 16, 16
          %275 = vsyncadd %s266, %s274
          %s276 = smul.addr %s272, 16
          %s277 = scalar_lea.hbm %s2, %s276
          %s279 = sshll.u32 %s268, 4
          %s280 = int_to_ptr.vmem [resolvable:$true] %s279
          %282 = dma.vmem_to_hbm [thread:$0]  %s280, 16, %s277, %s266
        $region40: #{tpu_custom_call.1} parent=27 // pred_fallthru
          _
      $region28: #{tpu_custom_call.1} parent=5 // pred_fallthru
        _
      %p283 = scmp.le.s32.totalorder 2, %s17
      // Predicated region
      $region41: #{tpu_custom_call.1} parent=5 // pred_check
        %p284 = pneg %p283
      $region42: #{tpu_custom_call.1} parent=5 // pred_check_branch
        %286 = sbr.rel (%p284) target = $region44
      $region43: #{tpu_custom_call.1} parent=5 // pred_region
        %s287 = ssub.s32 %s17, 2
        // Predicated region
        $region45: #{tpu_custom_call.1} parent=43 // pred_check
          %p288 = pneg %p127
        $region46: #{tpu_custom_call.1} parent=43 // pred_check_branch
          %290 = sbr.rel (%p288) target = $region48
        $region47: #{tpu_custom_call.1} parent=43 // pred_region
          %s291 = sand.u32 %s112, 1
          %s292 = scalar_lea.sflag [#allocation5], %s291
          %s293 = sand.u32 %s112, 1
          %s294 = scalar_lea.vmem [#allocation8], %s293
          %295 = dma.done %s292, 16
        $region48: #{tpu_custom_call.1} parent=43 // pred_fallthru
          _
      $region44: #{tpu_custom_call.1} parent=5 // pred_fallthru
        _
    $region6: #{tpu_custom_call.1} parent=1 // loop_footer
      %s21 = sadd.s32 1, %s17
    $region7: #{tpu_custom_call.1} parent=1 // loop_footer_branch
      %16 = sbr.rel target = $region3
    $region8: #{tpu_custom_call.1} parent=1 // loop_exit
      _
    %296 = vsyncpa [#allocation4], 1
    %s297 = scalar_lea.sflag [#allocation4], 1
    %298 = vsyncpa %s297, 1
    %299 = vsyncpa [#allocation7], 1
    %s300 = scalar_lea.sflag [#allocation7], 1
    %301 = vsyncpa %s300, 1
    %302 = vsyncpa [#allocation5], 1
    %s303 = scalar_lea.sflag [#allocation5], 1
    %304 = vsyncpa %s303, 1

</llo_original>
